<compile_context>
chip_gen: v7x
topology: tpu7x:2x2x1
jax: 0.10.0
libtpu: 0.0.40
codegen_flags: <defaults>
</compile_context>

<pallas_src>
import jax
import jax.numpy as jnp
from jax.experimental import pallas as pl
from jax.experimental.pallas import tpu as pltpu

# ---- model hyper-parameters --------------------------------------------------
N, C_IN, H, W = 2, 4, 16, 16      # batch, in-channels, spatial
C_OUT = 8                         # conv output channels
K = 3                             # 3x3 conv, padding=1 -> same spatial size
NUM_CLASSES = 10
CLS16 = 16                        # classes padded only to 16 on the HBM side
CIH = C_IN * H                    # 64    conv contraction sub-axis, index ci*16 + h
CH = C_OUT * H                    # 128   activation lane axis,      index c*16 + h
NW = N * W                        # 32    batched row axis,          index n*16 + w
FEAT = C_OUT * H * W              # 2048  flattened feature size (PyTorch C,H,W order)


# ---- fused kernel: base (conv3x3 + bias + ReLU) + classifier (Linear) --------
def fused_kernel(x_ref, wall_ref, bconv_ref, wfc_ref, bfc_ref, o_ref):
    # x_ref     : (N, C_IN, H, W) f32   raw NCHW input
    # wall_ref  : (3*CIH, CH)     bf16  conv weights, 3 per-dw folded blocks stacked on rows
    # bconv_ref : (1, CH)         f32   conv bias broadcast over h (lane index c*16+h)
    # wfc_ref   : (CH, W*CLS16)   bf16  classifier weight, column w*16+j = class j, column w
    # bfc_ref   : (1, CLS16)      f32   classifier bias, zero-padded 10 -> 16
    # o_ref     : (N, NUM_CLASSES) f32  logits (PyTorch layout, no wrapper slice needed)

    # ---- one-shot batched input relayout: (N, C_IN, H, W) -> (NW, CIH) --------
    # rows = n*16 + w, lanes = ci*16 + h   (done once, before any compute; N == 2 unrolled)
    xt = jnp.concatenate(
        [x_ref[0].reshape(CIH, W).T, x_ref[1].reshape(CIH, W).T], axis=0)      # (32, 64)

    # row -> w position (identical for both samples); reused by the FC mask below
    wpos = jax.lax.broadcasted_iota(jnp.int32, (NW, 1), 0) & (W - 1)           # (32, 1)

    # ---- w-shifted copies (conv padding=1 and the cross-sample row are zeroed) -
    zrow = jnp.zeros((1, CIH), jnp.float32)
    x_m = jnp.where(wpos == 0, 0.0,
                    jnp.concatenate([zrow, xt[:-1]], axis=0))                  # x[.., w-1]
    x_p = jnp.where(wpos == W - 1, 0.0,
                    jnp.concatenate([xt[1:], zrow], axis=0))                   # x[.., w+1]
    xcat = jnp.concatenate([x_m, xt, x_p], axis=1)                             # (32, 192)

    # ---- base: conv3x3(padding=1) + bias + ReLU as ONE K=192 GEMM -------------
    pre = jnp.dot(xcat.astype(jnp.bfloat16), wall_ref[...],
                  preferred_element_type=jnp.float32)                          # (32, 128)
    act = jnp.maximum(pre + bconv_ref[...], 0.0)                               # f32 VPU work

    # ---- classifier: Linear(2048 -> 10) ---------------------------------------
    # One GEMM over the CH contraction; lane block w' of row (n,w) holds the class scores
    # contributed by spatial column w' -> keep only w' == w (iota mask), tree-reduce the 16
    # lane blocks, then sum the 16 rows of each sample with a tiny selector matmul.
    t = jnp.dot(act.astype(jnp.bfloat16), wfc_ref[...],
                preferred_element_type=jnp.float32)                            # (32, 256)
    blk = jax.lax.broadcasted_iota(jnp.int32, (NW, W * CLS16), 1) >> 4         # lane // 16
    tm = jnp.where(wpos == blk, t, 0.0)                                        # (32, 256)

    parts = [tm[:, i * CLS16:(i + 1) * CLS16] for i in range(W)]               # 16 x (32,16)
    while len(parts) > 1:                                                      # log-depth tree
        parts = [parts[2 * i] + parts[2 * i + 1] for i in range(len(parts) // 2)]
    v = parts[0]                                                               # (32, 16)

    # sel[n, r] = 1 if row r belongs to sample n  -> per-sample row-sum on the MXU
    sel = ((jax.lax.broadcasted_iota(jnp.int32, (N, NW), 1) >> 4)
           == jax.lax.broadcasted_iota(jnp.int32, (N, NW), 0)).astype(jnp.float32)
    logits = jnp.dot(sel, v, preferred_element_type=jnp.float32) + bfc_ref[...]  # (2, 16)
    o_ref[...] = logits[:, :NUM_CLASSES]                                       # single store


# ---- wrapper: full DecoupledModel.forward ------------------------------------
@jax.jit
def decoupled_model_forward(x_nchw, packed):
    # Single fused, gridless pallas_call: total on-chip footprint is ~130 KiB (well under the
    # default VMEM window on every generation), and the weight DMA is now ~112 KiB, so the
    # kernel is purely launch-overhead bound -> no grid / no pipelining needed.
    # (On v7x with a real batch size, expose batch as grid=(N//blk,) with
    #  dimension_semantics=("parallel",) to use both TensorCores.)
    vmem = pl.BlockSpec(memory_space=pltpu.MemorySpace.VMEM)
    return pl.pallas_call(
        fused_kernel,
        out_shape=jax.ShapeDtypeStruct((N, NUM_CLASSES), jnp.float32),
        in_specs=[vmem] * 5,
        out_specs=vmem,
    )(x_nchw, packed["wall"], packed["bconv"], packed["wfc"], packed["bfc"])


# ---- parameters --------------------------------------------------------------
def init_params(key):
    """Native PyTorch-layout parameters (what nn.Conv2d / nn.Linear hold)."""
    k1, k2, k3, k4 = jax.random.split(key, 4)
    conv_w = jax.random.normal(k1, (C_OUT, C_IN, K, K), jnp.float32) * 0.1   # OIHW
    conv_b = jax.random.normal(k2, (C_OUT,), jnp.float32) * 0.1
    fc_w = jax.random.normal(k3, (NUM_CLASSES, FEAT), jnp.float32) * 0.02    # (10, 2048)
    fc_b = jax.random.normal(k4, (NUM_CLASSES,), jnp.float32) * 0.02
    return {"conv_w": conv_w, "conv_b": conv_b, "fc_w": fc_w, "fc_b": fc_b}


def pack_params(p):
    """One-time re-layout of the PyTorch weights into the kernel's (bf16) layouts."""
    conv_w, conv_b, fc_w, fc_b = p["conv_w"], p["conv_b"], p["fc_w"], p["fc_b"]

    def eye(k):
        return jnp.eye(H, dtype=jnp.float32, k=k)

    # wall[(dw+1)*64 + ci*16 + h', c*16 + h] = conv_w[c, ci, (h'-h)+1, dw+1]  for |h'-h| <= 1
    # (vertical tap offsets + their zero padding folded in; the three dw blocks are stacked
    #  along the contraction axis to match xcat = [x(w-1), x(w), x(w+1)])
    blocks = [sum(jnp.kron(conv_w[:, :, dh + 1, dw + 1].T, eye(-dh)) for dh in (-1, 0, 1))
              for dw in (-1, 0, 1)]
    wall = jnp.concatenate(blocks, axis=0).astype(jnp.bfloat16)              # (192, 128)
    # conv bias broadcast over h so it adds directly onto the (n*w, c*16+h) tile
    bconv = jnp.repeat(conv_b, H).reshape(1, CH)                             # (1, 128) f32
    # wfc[c*16+h, w*16+j] = fc_w[j, c*256 + h*16 + w]   (classes zero-padded 10 -> 16 only)
    fc4 = jnp.zeros((CLS16, C_OUT, H, W), jnp.float32).at[:NUM_CLASSES].set(
        fc_w.reshape(NUM_CLASSES, C_OUT, H, W))
    wfc = jnp.transpose(fc4, (1, 2, 3, 0)).reshape(CH, W * CLS16).astype(jnp.bfloat16)
    bfc = jnp.zeros((1, CLS16), jnp.float32).at[0, :NUM_CLASSES].set(fc_b)   # (1, 16) f32
    return {"wall": wall, "bconv": bconv, "wfc": wfc, "bfc": bfc}


# ---- plain-JAX reference (numerical sanity check, all f32, original weights) --
def reference_forward(x, p):
    conv = jax.lax.conv_general_dilated(
        x, p["conv_w"], window_strides=(1, 1), padding=[(1, 1), (1, 1)],
        dimension_numbers=("NCHW", "OIHW", "NCHW"))
    conv = conv + p["conv_b"][None, :, None, None]
    feats = jnp.maximum(conv, 0.0).reshape(N, FEAT)      # PyTorch (C, H, W) flatten
    return feats @ p["fc_w"].T + p["fc_b"][None, :]


if __name__ == "__main__":
    key = jax.random.PRNGKey(0)
    kx, kp = jax.random.split(key)
    x = jax.random.normal(kx, (N, C_IN, H, W), jnp.float32)   # NCHW, like PyTorch
    torch_params = init_params(kp)
    packed = pack_params(torch_params)                   # one-time weight re-layout

    out = jax.block_until_ready(decoupled_model_forward(x, packed))
    assert out.shape == (N, NUM_CLASSES) and out.dtype == jnp.float32

    ref = reference_forward(x, torch_params)
    max_err = float(jnp.max(jnp.abs(out - ref)))
    # bf16 MXU operands (weights stored bf16, activations cast at the MXU boundary),
    # f32 accumulation -> ~1e-3 expected error; 1e-2 tolerance per the review guidance.
    assert jnp.allclose(out, ref, atol=1e-2, rtol=1e-2), f"max abs err {max_err}"
    print("KERNEL_OK")
</pallas_src>

<mosaic_0001>
module attributes {stable_mosaic.version = 11 : i64} {
  func.func @fused_kernel(%arg0: memref<2x4x16x16xf32, #tpu.memory_space<vmem>>, %arg1: memref<192x128xbf16, #tpu.memory_space<vmem>>, %arg2: memref<1x128xf32, #tpu.memory_space<vmem>>, %arg3: memref<128x256xbf16, #tpu.memory_space<vmem>>, %arg4: memref<1x16xf32, #tpu.memory_space<vmem>>, %arg5: memref<2x10xf32, #tpu.memory_space<vmem>>) attributes {dimension_semantics = [], scalar_prefetch = 0 : i64, scratch_operands = 0 : i64, tpu.core_type = #tpu.core_type<tc>} {
    %c0 = arith.constant 0 : index
    %c0_0 = arith.constant 0 : index
    %c0_1 = arith.constant 0 : index
    %c0_2 = arith.constant 0 : index
    %0 = vector.load %arg0[%c0, %c0_0, %c0_1, %c0_2] : memref<2x4x16x16xf32, #tpu.memory_space<vmem>>, vector<1x4x16x16xf32>
    %1 = vector.shape_cast %0 : vector<1x4x16x16xf32> to vector<4x16x16xf32>
    %2 = vector.shape_cast %1 : vector<4x16x16xf32> to vector<64x16xf32>
    %3 = tpu.transpose %2, [1, 0] : vector<64x16xf32> -> vector<16x64xf32>
    %c1 = arith.constant 1 : index
    %c0_3 = arith.constant 0 : index
    %c0_4 = arith.constant 0 : index
    %c0_5 = arith.constant 0 : index
    %4 = vector.load %arg0[%c1, %c0_3, %c0_4, %c0_5] : memref<2x4x16x16xf32, #tpu.memory_space<vmem>>, vector<1x4x16x16xf32>
    %5 = vector.shape_cast %4 : vector<1x4x16x16xf32> to vector<4x16x16xf32>
    %6 = vector.shape_cast %5 : vector<4x16x16xf32> to vector<64x16xf32>
    %7 = tpu.transpose %6, [1, 0] : vector<64x16xf32> -> vector<16x64xf32>
    %8 = tpu.concatenate %3, %7 in 0 : vector<16x64xf32>, vector<16x64xf32> -> vector<32x64xf32>
    %9 = tpu.iota {dimensions = array<i32: 0>} : vector<32x1xi32>
    %c15_i32 = arith.constant 15 : i32
    %10 = vector.broadcast %c15_i32 : i32 to vector<32x1xi32>
    %11 = arith.andi %9, %10 : vector<32x1xi32>
    %cst = arith.constant 0.000000e+00 : f32
    %12 = vector.broadcast %cst : f32 to vector<1x64xf32>
    %c0_i32 = arith.constant 0 : i32
    %13 = vector.broadcast %c0_i32 : i32 to vector<32x1xi32>
    %14 = arith.cmpi eq, %11, %13 : vector<32x1xi32>
    %15 = vector.extract_strided_slice %8 {offsets = [0, 0], sizes = [31, 64], strides = [1, 1]} : vector<32x64xf32> to vector<31x64xf32>
    %16 = tpu.concatenate %12, %15 in 0 : vector<1x64xf32>, vector<31x64xf32> -> vector<32x64xf32>
    %cst_6 = arith.constant 0.000000e+00 : f32
    %17 = vector.shape_cast %14 : vector<32x1xi1> to vector<32x1xi1>
    %18 = vector.broadcast %17 : vector<32x1xi1> to vector<32x64xi1>
    %19 = vector.broadcast %cst_6 : f32 to vector<32x64xf32>
    %20 = arith.select %18, %19, %16 : vector<32x64xi1>, vector<32x64xf32>
    %c15_i32_7 = arith.constant 15 : i32
    %21 = vector.broadcast %c15_i32_7 : i32 to vector<32x1xi32>
    %22 = arith.cmpi eq, %11, %21 : vector<32x1xi32>
    %23 = vector.extract_strided_slice %8 {offsets = [1, 0], sizes = [31, 64], strides = [1, 1]} : vector<32x64xf32> to vector<31x64xf32>
    %24 = tpu.concatenate %23, %12 in 0 : vector<31x64xf32>, vector<1x64xf32> -> vector<32x64xf32>
    %cst_8 = arith.constant 0.000000e+00 : f32
    %25 = vector.shape_cast %22 : vector<32x1xi1> to vector<32x1xi1>
    %26 = vector.broadcast %25 : vector<32x1xi1> to vector<32x64xi1>
    %27 = vector.broadcast %cst_8 : f32 to vector<32x64xf32>
    %28 = arith.select %26, %27, %24 : vector<32x64xi1>, vector<32x64xf32>
    %29 = tpu.concatenate %20, %8, %28 in 1 : vector<32x64xf32>, vector<32x64xf32>, vector<32x64xf32> -> vector<32x192xf32>
    %30 = arith.truncf %29 : vector<32x192xf32> to vector<32x192xbf16>
    %c0_9 = arith.constant 0 : index
    %c0_10 = arith.constant 0 : index
    %31 = vector.load %arg1[%c0_9, %c0_10] : memref<192x128xbf16, #tpu.memory_space<vmem>>, vector<192x128xbf16>
    %cst_11 = arith.constant dense<0.000000e+00> : vector<32x128xf32>
    %32 = tpu.matmul %30, %31, %cst_11 {dimension_numbers = #tpu.dot_dimension_numbers<[1], [0], [0], [1], [0, 0, 1, 1], [], []>} : vector<32x192xbf16>, vector<192x128xbf16>, vector<32x128xf32> -> vector<32x128xf32>
    %c0_12 = arith.constant 0 : index
    %c0_13 = arith.constant 0 : index
    %33 = vector.load %arg2[%c0_12, %c0_13] : memref<1x128xf32, #tpu.memory_space<vmem>>, vector<1x128xf32>
    %34 = vector.broadcast %33 : vector<1x128xf32> to vector<32x128xf32>
    %35 = arith.addf %32, %34 : vector<32x128xf32>
    %cst_14 = arith.constant 0.000000e+00 : f32
    %36 = vector.broadcast %cst_14 : f32 to vector<32x128xf32>
    %37 = arith.maximumf %35, %36 : vector<32x128xf32>
    %38 = arith.truncf %37 : vector<32x128xf32> to vector<32x128xbf16>
    %c0_15 = arith.constant 0 : index
    %c0_16 = arith.constant 0 : index
    %39 = vector.load %arg3[%c0_15, %c0_16] : memref<128x256xbf16, #tpu.memory_space<vmem>>, vector<128x256xbf16>
    %cst_17 = arith.constant dense<0.000000e+00> : vector<32x256xf32>
    %40 = tpu.matmul %38, %39, %cst_17 {dimension_numbers = #tpu.dot_dimension_numbers<[1], [0], [0], [1], [0, 0, 1, 1], [], []>} : vector<32x128xbf16>, vector<128x256xbf16>, vector<32x256xf32> -> vector<32x256xf32>
    %41 = tpu.iota {dimensions = array<i32: 1>} : vector<32x256xi32>
    %c4_i32 = arith.constant 4 : i32
    %42 = vector.broadcast %c4_i32 : i32 to vector<32x256xi32>
    %43 = arith.shrsi %41, %42 : vector<32x256xi32>
    %44 = vector.broadcast %11 : vector<32x1xi32> to vector<32x256xi32>
    %45 = arith.cmpi eq, %44, %43 : vector<32x256xi32>
    %cst_18 = arith.constant 0.000000e+00 : f32
    %46 = vector.broadcast %cst_18 : f32 to vector<32x256xf32>
    %47 = arith.select %45, %40, %46 : vector<32x256xi1>, vector<32x256xf32>
    %48 = vector.extract_strided_slice %47 {offsets = [0, 0], sizes = [32, 16], strides = [1, 1]} : vector<32x256xf32> to vector<32x16xf32>
    %49 = vector.extract_strided_slice %47 {offsets = [0, 16], sizes = [32, 16], strides = [1, 1]} : vector<32x256xf32> to vector<32x16xf32>
    %50 = vector.extract_strided_slice %47 {offsets = [0, 32], sizes = [32, 16], strides = [1, 1]} : vector<32x256xf32> to vector<32x16xf32>
    %51 = vector.extract_strided_slice %47 {offsets = [0, 48], sizes = [32, 16], strides = [1, 1]} : vector<32x256xf32> to vector<32x16xf32>
    %52 = vector.extract_strided_slice %47 {offsets = [0, 64], sizes = [32, 16], strides = [1, 1]} : vector<32x256xf32> to vector<32x16xf32>
    %53 = vector.extract_strided_slice %47 {offsets = [0, 80], sizes = [32, 16], strides = [1, 1]} : vector<32x256xf32> to vector<32x16xf32>
    %54 = vector.extract_strided_slice %47 {offsets = [0, 96], sizes = [32, 16], strides = [1, 1]} : vector<32x256xf32> to vector<32x16xf32>
    %55 = vector.extract_strided_slice %47 {offsets = [0, 112], sizes = [32, 16], strides = [1, 1]} : vector<32x256xf32> to vector<32x16xf32>
    %56 = vector.extract_strided_slice %47 {offsets = [0, 128], sizes = [32, 16], strides = [1, 1]} : vector<32x256xf32> to vector<32x16xf32>
    %57 = vector.extract_strided_slice %47 {offsets = [0, 144], sizes = [32, 16], strides = [1, 1]} : vector<32x256xf32> to vector<32x16xf32>
    %58 = vector.extract_strided_slice %47 {offsets = [0, 160], sizes = [32, 16], strides = [1, 1]} : vector<32x256xf32> to vector<32x16xf32>
    %59 = vector.extract_strided_slice %47 {offsets = [0, 176], sizes = [32, 16], strides = [1, 1]} : vector<32x256xf32> to vector<32x16xf32>
    %60 = vector.extract_strided_slice %47 {offsets = [0, 192], sizes = [32, 16], strides = [1, 1]} : vector<32x256xf32> to vector<32x16xf32>
    %61 = vector.extract_strided_slice %47 {offsets = [0, 208], sizes = [32, 16], strides = [1, 1]} : vector<32x256xf32> to vector<32x16xf32>
    %62 = vector.extract_strided_slice %47 {offsets = [0, 224], sizes = [32, 16], strides = [1, 1]} : vector<32x256xf32> to vector<32x16xf32>
    %63 = vector.extract_strided_slice %47 {offsets = [0, 240], sizes = [32, 16], strides = [1, 1]} : vector<32x256xf32> to vector<32x16xf32>
    %64 = arith.addf %48, %49 : vector<32x16xf32>
    %65 = arith.addf %50, %51 : vector<32x16xf32>
    %66 = arith.addf %52, %53 : vector<32x16xf32>
    %67 = arith.addf %54, %55 : vector<32x16xf32>
    %68 = arith.addf %56, %57 : vector<32x16xf32>
    %69 = arith.addf %58, %59 : vector<32x16xf32>
    %70 = arith.addf %60, %61 : vector<32x16xf32>
    %71 = arith.addf %62, %63 : vector<32x16xf32>
    %72 = arith.addf %64, %65 : vector<32x16xf32>
    %73 = arith.addf %66, %67 : vector<32x16xf32>
    %74 = arith.addf %68, %69 : vector<32x16xf32>
    %75 = arith.addf %70, %71 : vector<32x16xf32>
    %76 = arith.addf %72, %73 : vector<32x16xf32>
    %77 = arith.addf %74, %75 : vector<32x16xf32>
    %78 = arith.addf %76, %77 : vector<32x16xf32>
    %79 = tpu.iota {dimensions = array<i32: 1>} : vector<2x32xi32>
    %c4_i32_19 = arith.constant 4 : i32
    %80 = vector.broadcast %c4_i32_19 : i32 to vector<2x32xi32>
    %81 = arith.shrsi %79, %80 : vector<2x32xi32>
    %82 = tpu.iota {dimensions = array<i32: 0>} : vector<2x32xi32>
    %83 = arith.cmpi eq, %81, %82 : vector<2x32xi32>
    %84 = arith.extui %83 : vector<2x32xi1> to vector<2x32xi32>
    %85 = arith.sitofp %84 : vector<2x32xi32> to vector<2x32xf32>
    %cst_20 = arith.constant dense<0.000000e+00> : vector<2x16xf32>
    %86 = tpu.matmul %85, %78, %cst_20 {dimension_numbers = #tpu.dot_dimension_numbers<[1], [0], [0], [1], [0, 0, 1, 1], [], []>} : vector<2x32xf32>, vector<32x16xf32>, vector<2x16xf32> -> vector<2x16xf32>
    %c0_21 = arith.constant 0 : index
    %c0_22 = arith.constant 0 : index
    %87 = vector.load %arg4[%c0_21, %c0_22] : memref<1x16xf32, #tpu.memory_space<vmem>>, vector<1x16xf32>
    %88 = vector.broadcast %87 : vector<1x16xf32> to vector<2x16xf32>
    %89 = arith.addf %86, %88 : vector<2x16xf32>
    %90 = vector.extract_strided_slice %89 {offsets = [0, 0], sizes = [2, 10], strides = [1, 1]} : vector<2x16xf32> to vector<2x10xf32>
    %c0_23 = arith.constant 0 : index
    %c0_24 = arith.constant 0 : index
    %91 = vector.load %arg5[%c0_23, %c0_24] : memref<2x10xf32, #tpu.memory_space<vmem>>, vector<2x10xf32>
    tpu.vector_store %arg5[%c0_23, %c0_24], %90 {strides = array<i32>} : memref<2x10xf32, #tpu.memory_space<vmem>>, vector<2x10xf32>,
    return
  }
}

</mosaic_0001>

<llo_original>
// kernel: decoupled_model_forward.1
$region0: #{decoupled_model_forward.1}
  #allocation0 [shape = 'u32[]', space=smem, size = 0x4, offset = 0x4, fixed_abs, tag = 'smem constant byte address 0x4 - core index']
  #allocation1 [shape = 'u32[144,128]{1,0:T(1,128)}', space=vmem, size = 0x12000, scoped, tag = 'internal scratch']
  %s0 = inlined_call_operand.hbm [shape: f32[2,4,16,16], index: 0, kind: input, shape index: {}]
  %s1 = inlined_call_operand.hbm [shape: bf16[192,128], index: 1, kind: input, shape index: {}]
  %s2 = inlined_call_operand.vmem [shape: f32[1,128], index: 2, kind: input, shape index: {}]
  %s3 = inlined_call_operand.hbm [shape: bf16[128,256], index: 3, kind: input, shape index: {}]
  %s4 = inlined_call_operand.vmem [shape: f32[1,16], index: 4, kind: input, shape index: {}]
  %s5 = inlined_call_operand.hbm [shape: f32[2,10], index: 5, kind: output, shape index: {}]
  %s6 = sld [smem:[#allocation0]]
  $region42: #{decoupled_model_forward.1} parent=0
    _
  %s8 = ssub.s32 1, %s6
  %s9 = scalar_select 0, %s8, %s6
  $region1: #{decoupled_model_forward.1} parent=0
    #allocation2 [shape = 'u8[65536]{0}', space=vmem, size = 0x10000, scoped, tag = 'input window, operand 0, single buffered']
    #allocation3 [shape = 's32[1]{0}', space=sflag, size = 0x4, scoped, tag = 'scoped memory for decoupled_model_forward.1']
    #allocation4 [shape = 's32[1]{0}', space=sflag, size = 0x4, scoped, tag = 'scoped memory for decoupled_model_forward.1']
    #allocation5 [shape = 'u8[49152]{0}', space=vmem, size = 0xc000, scoped, tag = 'input window, operand 1, single buffered']
    #allocation6 [shape = 's32[1]{0}', space=sflag, size = 0x4, scoped, tag = 'scoped memory for decoupled_model_forward.1']
    #allocation7 [shape = 'u8[65536]{0}', space=vmem, size = 0x10000, scoped, tag = 'input window, operand 3, single buffered']
    #allocation8 [shape = 'u8[1024]{0}', space=vmem, size = 0x400, scoped, tag = 'output window, operand 0, single buffered']
    %10 = vsyncpa [#allocation3], 0
    %11 = vsyncpa [#allocation6], 0
    %12 = vsyncpa [#allocation4], 0
    // Predicated region
    $region2: #{decoupled_model_forward.1} parent=1 // pred_check
      _
    $region3: #{decoupled_model_forward.1} parent=1 // pred_check_branch
      %14 = sbr.rel (0) target = $region5
    $region4: #{decoupled_model_forward.1} parent=1 // pred_region
      %s16 = ssub.s32 2048, 2048
      %17 = vsyncadd [#allocation3], %s16
      %s18 = sshll.u32 [#allocation2], 4
      %s19 = int_to_ptr.vmem [resolvable:$true] %s18
      %24 = dma.hbm_to_vmem [thread:$0]  %s0, 2048, %s19, [#allocation3], 128, 128, 8
    $region5: #{decoupled_model_forward.1} parent=1 // pred_fallthru
      _
    // Predicated region
    $region6: #{decoupled_model_forward.1} parent=1 // pred_check
      _
    $region7: #{decoupled_model_forward.1} parent=1 // pred_check_branch
      %26 = sbr.rel (0) target = $region9
    $region8: #{decoupled_model_forward.1} parent=1 // pred_region
      %s28 = ssub.s32 1536, 1536
      %29 = vsyncadd [#allocation6], %s28
      %s30 = sshll.u32 [#allocation5], 4
      %s31 = int_to_ptr.vmem [resolvable:$true] %s30
      %36 = dma.hbm_to_vmem [thread:$0]  %s1, 1536, %s31, [#allocation6], 64, 64, 4
    $region9: #{decoupled_model_forward.1} parent=1 // pred_fallthru
      _
    // Predicated region
    $region10: #{decoupled_model_forward.1} parent=1 // pred_check
      _
    $region11: #{decoupled_model_forward.1} parent=1 // pred_check_branch
      %38 = sbr.rel (0) target = $region13
    $region12: #{decoupled_model_forward.1} parent=1 // pred_region
      _
    $region13: #{decoupled_model_forward.1} parent=1 // pred_fallthru
      _
    // Predicated region
    $region14: #{decoupled_model_forward.1} parent=1 // pred_check
      _
    $region15: #{decoupled_model_forward.1} parent=1 // pred_check_branch
      %40 = sbr.rel (0) target = $region17
    $region16: #{decoupled_model_forward.1} parent=1 // pred_region
      %s42 = ssub.s32 2048, 2048
      %43 = vsyncadd [#allocation6], %s42
      %s44 = sshll.u32 [#allocation7], 4
      %s45 = int_to_ptr.vmem [resolvable:$true] %s44
      %50 = dma.hbm_to_vmem [thread:$0]  %s3, 2048, %s45, [#allocation6], 128, 128, 8
    $region17: #{decoupled_model_forward.1} parent=1 // pred_fallthru
      _
    // Predicated region
    $region18: #{decoupled_model_forward.1} parent=1 // pred_check
      _
    $region19: #{decoupled_model_forward.1} parent=1 // pred_check_branch
      %52 = sbr.rel (0) target = $region21
    $region20: #{decoupled_model_forward.1} parent=1 // pred_region
      _
    $region21: #{decoupled_model_forward.1} parent=1 // pred_fallthru
      _
    // Predicated region
    $region22: #{decoupled_model_forward.1} parent=1 // pred_check
      _
    $region23: #{decoupled_model_forward.1} parent=1 // pred_check_branch
      %54 = sbr.rel (0) target = $region25
    $region24: #{decoupled_model_forward.1} parent=1 // pred_region
      %55 = dma.done [#allocation3], 2048
    $region25: #{decoupled_model_forward.1} parent=1 // pred_fallthru
      _
    // Predicated region
    $region26: #{decoupled_model_forward.1} parent=1 // pred_check
      _
    $region27: #{decoupled_model_forward.1} parent=1 // pred_check_branch
      %57 = sbr.rel (0) target = $region29
    $region28: #{decoupled_model_forward.1} parent=1 // pred_region
      %58 = dma.done [#allocation6], 1536
    $region29: #{decoupled_model_forward.1} parent=1 // pred_fallthru
      _
    // Predicated region
    $region30: #{decoupled_model_forward.1} parent=1 // pred_check
      _
    $region31: #{decoupled_model_forward.1} parent=1 // pred_check_branch
      %60 = sbr.rel (0) target = $region33
    $region32: #{decoupled_model_forward.1} parent=1 // pred_region
      %61 = dma.done [#allocation6], 2048
    $region33: #{decoupled_model_forward.1} parent=1 // pred_fallthru
      _
    %v63 = vld [vmem:[#allocation2] sm:$0xff]
    %v64 = vld [vmem:[#allocation2 + $0x8] sm:$0xff]
    %v65 = vld [vmem:[#allocation2 + $0x10] sm:$0xff]
    %v66 = vld [vmem:[#allocation2 + $0x18] sm:$0xff]
    %v67 = vld [vmem:[#allocation2 + $0x20] sm:$0xff]
    %v68 = vld [vmem:[#allocation2 + $0x28] sm:$0xff]
    %v69 = vld [vmem:[#allocation2 + $0x30] sm:$0xff]
    %v70 = vld [vmem:[#allocation2 + $0x38] sm:$0xff]
    %71 = vxpose.xlu0.b32.start [1/16] %v63, 128
    %72 = vxpose.xlu0.b32.cont [2/16] %v64, 128
    %73 = vxpose.xlu0.b32.cont [3/16] %v65, 128
    %74 = vxpose.xlu0.b32.cont [4/16] %v66, 128
    %75 = vxpose.xlu0.b32.cont [5/16] %v67, 128
    %76 = vxpose.xlu0.b32.cont [6/16] %v68, 128
    %77 = vxpose.xlu0.b32.cont [7/16] %v69, 128
    %78 = vxpose.xlu0.b32.cont [8/16] %v70, 128
    %79 = vxpose.xlu0.b32.cont [9/16] 0.0, 128
    %80 = vxpose.xlu0.b32.cont [10/16] 0.0, 128
    %81 = vxpose.xlu0.b32.cont [11/16] 0.0, 128
    %82 = vxpose.xlu0.b32.cont [12/16] 0.0, 128
    %83 = vxpose.xlu0.b32.cont [13/16] 0.0, 128
    %84 = vxpose.xlu0.b32.cont [14/16] 0.0, 128
    %85 = vxpose.xlu0.b32.cont [15/16] 0.0, 128
    %86 = vxpose.xlu0.b32.end [16/16] 0.0, 128
    %v87 = vpop.trf.xlu0
    %v88 = vpop.trf.xlu0
    %v89 = vpop.trf.xlu0
    %v90 = vpop.trf.xlu0
    %v91 = vpop.trf.xlu0
    %v92 = vpop.trf.xlu0
    %v93 = vpop.trf.xlu0
    %v94 = vpop.trf.xlu0
    %v95 = vpop.trf.xlu0
    %v96 = vpop.trf.xlu0
    %v97 = vpop.trf.xlu0
    %v98 = vpop.trf.xlu0
    %v99 = vpop.trf.xlu0
    %v100 = vpop.trf.xlu0
    %v101 = vpop.trf.xlu0
    %v102 = vpop.trf.xlu0
    %s103 = scalar_lea.vmem [#allocation2], 64
    %v104 = vld [vmem:[%s103] sm:$0xff]
    %v105 = vld [vmem:[%s103 + $0x8] sm:$0xff]
    %v106 = vld [vmem:[%s103 + $0x10] sm:$0xff]
    %v107 = vld [vmem:[%s103 + $0x18] sm:$0xff]
    %v108 = vld [vmem:[%s103 + $0x20] sm:$0xff]
    %v109 = vld [vmem:[%s103 + $0x28] sm:$0xff]
    %v110 = vld [vmem:[%s103 + $0x30] sm:$0xff]
    %v111 = vld [vmem:[%s103 + $0x38] sm:$0xff]
    %112 = vxpose.xlu0.b32.start [1/16] %v104, 128
    %113 = vxpose.xlu0.b32.cont [2/16] %v105, 128
    %114 = vxpose.xlu0.b32.cont [3/16] %v106, 128
    %115 = vxpose.xlu0.b32.cont [4/16] %v107, 128
    %116 = vxpose.xlu0.b32.cont [5/16] %v108, 128
    %117 = vxpose.xlu0.b32.cont [6/16] %v109, 128
    %118 = vxpose.xlu0.b32.cont [7/16] %v110, 128
    %119 = vxpose.xlu0.b32.cont [8/16] %v111, 128
    %120 = vxpose.xlu0.b32.cont [9/16] 0.0, 128
    %121 = vxpose.xlu0.b32.cont [10/16] 0.0, 128
    %122 = vxpose.xlu0.b32.cont [11/16] 0.0, 128
    %123 = vxpose.xlu0.b32.cont [12/16] 0.0, 128
    %124 = vxpose.xlu0.b32.cont [13/16] 0.0, 128
    %125 = vxpose.xlu0.b32.cont [14/16] 0.0, 128
    %126 = vxpose.xlu0.b32.cont [15/16] 0.0, 128
    %127 = vxpose.xlu0.b32.end [16/16] 0.0, 128
    %v128 = vpop.trf.xlu0
    %v129 = vpop.trf.xlu0
    %v130 = vpop.trf.xlu0
    %v131 = vpop.trf.xlu0
    %v132 = vpop.trf.xlu0
    %v133 = vpop.trf.xlu0
    %v134 = vpop.trf.xlu0
    %v135 = vpop.trf.xlu0
    %v136 = vpop.trf.xlu0
    %v137 = vpop.trf.xlu0
    %v138 = vpop.trf.xlu0
    %v139 = vpop.trf.xlu0
    %v140 = vpop.trf.xlu0
    %v141 = vpop.trf.xlu0
    %v142 = vpop.trf.xlu0
    %v143 = vpop.trf.xlu0
    %v144 = vlaneseq
    %v145 = vshrl.u32 %v144, 7
    %v146 = vadd.s32 %v145, 8
    %v147 = vadd.s32 %v145, 16
    %v148 = vadd.s32 %v145, 24
    %v149 = vand.u32 %v145, 15
    %v150 = vand.u32 %v146, 15
    %v151 = vand.u32 %v147, 15
    %v152 = vand.u32 %v148, 15
    %vm153 = vcmp.eq.s32.totalorder %v149, 0
    %vm154 = vcmp.eq.s32.totalorder %v150, 0
    %vm155 = vcmp.eq.s32.totalorder %v151, 0
    %vm156 = vcmp.eq.s32.totalorder %v152, 0
    %vm161 = vcmask 1040384
    %v162 = vrot.slane %v87, 7
    %v163 = vrot.slane %v88, 7
    %v164 = vsel %vm161, %v162, %v163
    %v165 = vrot.slane %v128, 7
    %v166 = vsel %vm161, %v163, %v165
    %v167 = vrot.slane %v129, 7
    %v168 = vsel %vm161, %v165, %v167
    %v173 = vsel %vm161, 0.0, %v162
    %v174 = vsel %vm153, 1, 0
    %v175 = vsel %vm154, 1, 0
    %v176 = vsel %vm155, 1, 0
    %v177 = vsel %vm156, 1, 0
    %vm178 = vcmp.eq.s32.totalorder %v174, 1
    %vm179 = vcmp.eq.s32.totalorder %v175, 1
    %vm180 = vcmp.eq.s32.totalorder %v176, 1
    %vm181 = vcmp.eq.s32.totalorder %v177, 1
    %v182 = vsel %vm178, 0.0, %v173
    %v183 = vsel %vm179, 0.0, %v164
    %v184 = vsel %vm180, 0.0, %v166
    %v185 = vsel %vm181, 0.0, %v168
    %vm186 = vcmp.eq.s32.totalorder %v149, 15
    %vm187 = vcmp.eq.s32.totalorder %v150, 15
    %vm188 = vcmp.eq.s32.totalorder %v151, 15
    %vm189 = vcmp.eq.s32.totalorder %v152, 15
    %vm190 = vcmask 1046528
    %v191 = vrot.slane %v87, 1
    %v192 = vrot.slane %v88, 1
    %v193 = vsel %vm190, %v191, %v192
    %v194 = vrot.slane %v128, 1
    %v195 = vsel %vm190, %v192, %v194
    %v196 = vrot.slane %v129, 1
    %v197 = vsel %vm190, %v194, %v196
    %v202 = vsel %vm190, %v196, 0.0
    %v203 = vsel %vm186, 1, 0
    %v204 = vsel %vm187, 1, 0
    %v205 = vsel %vm188, 1, 0
    %v206 = vsel %vm189, 1, 0
    %vm207 = vcmp.eq.s32.totalorder %v203, 1
    %vm208 = vcmp.eq.s32.totalorder %v204, 1
    %vm209 = vcmp.eq.s32.totalorder %v205, 1
    %vm210 = vcmp.eq.s32.totalorder %v206, 1
    %v211 = vsel %vm207, 0.0, %v193
    %v212 = vsel %vm208, 0.0, %v195
    %v213 = vsel %vm209, 0.0, %v197
    %v214 = vsel %vm210, 0.0, %v202
    %215 = vrot.lane.b32.xlu0 %v87, 64
    %v216 = vpop.permute.xlu0 %215
    %217 = vrot.lane.b32.xlu0 %v88, 64
    %v218 = vpop.permute.xlu0 %217
    %219 = vrot.lane.b32.xlu0 %v128, 64
    %v220 = vpop.permute.xlu0 %219
    %221 = vrot.lane.b32.xlu0 %v129, 64
    %v222 = vpop.permute.xlu0 %221
    %vm227 = vcmask 523264
    %v228 = vsel %vm227, %v182, %v216
    %v229 = vsel %vm227, %v183, %v218
    %v230 = vsel %vm227, %v184, %v220
    %v231 = vsel %vm227, %v185, %v222
    %v232 = vpack.c.bf16 %v229, %v228
    %v233 = vpack.c.bf16 %v212, %v211
    %v234 = vpack.c.bf16 %v231, %v230
    %v235 = vpack.c.bf16 %v214, %v213
    %v236 = vld [vmem:[#allocation5] sm:$0xf]
    %v237 = vld [vmem:[#allocation5 + $0x4] sm:$0xf]
    %v238 = vld [vmem:[#allocation5 + $0x8] sm:$0xf]
    %v239 = vld [vmem:[#allocation5 + $0xc] sm:$0xf]
    %v240 = vld [vmem:[#allocation5 + $0x10] sm:$0xf]
    %v241 = vld [vmem:[#allocation5 + $0x14] sm:$0xf]
    %v242 = vld [vmem:[#allocation5 + $0x18] sm:$0xf]
    %v243 = vld [vmem:[#allocation5 + $0x1c] sm:$0xf]
    %v244 = vld [vmem:[#allocation5 + $0x20] sm:$0xf]
    %v245 = vld [vmem:[#allocation5 + $0x24] sm:$0xf]
    %v246 = vld [vmem:[#allocation5 + $0x28] sm:$0xf]
    %v247 = vld [vmem:[#allocation5 + $0x2c] sm:$0xf]
    %v248 = vld [vmem:[#allocation5 + $0x30] sm:$0xf]
    %v249 = vld [vmem:[#allocation5 + $0x34] sm:$0xf]
    %v250 = vld [vmem:[#allocation5 + $0x38] sm:$0xf]
    %v251 = vld [vmem:[#allocation5 + $0x3c] sm:$0xf]
    %v252 = vld [vmem:[#allocation5 + $0x40] sm:$0xf]
    %v253 = vld [vmem:[#allocation5 + $0x44] sm:$0xf]
    %v254 = vld [vmem:[#allocation5 + $0x48] sm:$0xf]
    %v255 = vld [vmem:[#allocation5 + $0x4c] sm:$0xf]
    %v256 = vld [vmem:[#allocation5 + $0x50] sm:$0xf]
    %v257 = vld [vmem:[#allocation5 + $0x54] sm:$0xf]
    %v258 = vld [vmem:[#allocation5 + $0x58] sm:$0xf]
    %v259 = vld [vmem:[#allocation5 + $0x5c] sm:$0xf]
    %v260 = vld [vmem:[%s2] sm:$0x1]
    %v262 = vlaneseq
    %v263 = vshrl.u32 %v262, 7
    %v264 = vsub.s32 0, %v263
    %v265 = vrot.slane %v260, %v264
    %v291 = vunpack.c.l.b16 %v236
    %v292 = vunpack.c.l.b16 %v237
    %v293 = vunpack.c.l.b16 %v238
    %v294 = vunpack.c.l.b16 %v239
    %v295 = vunpack.c.l.b16 %v240
    %v296 = vunpack.c.l.b16 %v241
    %v297 = vunpack.c.l.b16 %v242
    %v298 = vunpack.c.l.b16 %v243
    %v299 = vunpack.c.l.b16 %v244
    %v300 = vunpack.c.l.b16 %v245
    %v301 = vunpack.c.l.b16 %v246
    %v302 = vunpack.c.l.b16 %v247
    %v303 = vunpack.c.l.b16 %v248
    %v304 = vunpack.c.l.b16 %v249
    %v305 = vunpack.c.l.b16 %v250
    %v306 = vunpack.c.l.b16 %v251
    %v307 = vunpack.c.l.b16 %v252
    %v308 = vunpack.c.l.b16 %v253
    %v309 = vunpack.c.l.b16 %v254
    %v310 = vunpack.c.l.b16 %v255
    %v311 = vunpack.c.l.b16 %v256
    %v312 = vunpack.c.l.b16 %v257
    %v313 = vunpack.c.l.b16 %v258
    %v314 = vunpack.c.l.b16 %v259
    %v315 = vpack.c.b16 %v292, %v291
    %v316 = vpack.c.b16 %v294, %v293
    %v317 = vpack.c.b16 %v296, %v295
    %v318 = vpack.c.b16 %v298, %v297
    %v319 = vpack.c.b16 %v300, %v299
    %v320 = vpack.c.b16 %v302, %v301
    %v321 = vpack.c.b16 %v304, %v303
    %v322 = vpack.c.b16 %v306, %v305
    %v323 = vpack.c.b16 %v308, %v307
    %v324 = vpack.c.b16 %v310, %v309
    %v325 = vpack.c.b16 %v312, %v311
    %v326 = vpack.c.b16 %v314, %v313
    %v340 = vsel %vm227, %v233, 0
    %v343 = vsel %vm227, %v235, 0
    %345 = vmatprep.subr.bf16.mxu0 0
    %346 = vmatpush1.bf16.msra.mxu0 %v315
    %347 = vmatprep.subr.bf16.mxu0 0
    %348 = vmatpush1.bf16.msra.mxu0 %v316
    %349 = vmatprep.subr.bf16.mxu0 0
    %350 = vmatpush1.bf16.msra.mxu0 %v317
    %351 = vmatprep.subr.bf16.mxu0 0
    %352 = vmatpush1.bf16.msra.mxu0 %v318
    %353 = vmatprep.subr.bf16.mxu0 0
    %354 = vmatpush1.bf16.msra.mxu0 %v319
    %355 = vmatprep.subr.bf16.mxu0 0
    %356 = vmatpush1.bf16.msra.mxu0 %v320
    %357 = vmatprep.subr.bf16.mxu0 0
    %358 = vmatpush1.bf16.msra.mxu0 %v321
    %359 = vmatprep.subr.bf16.mxu0 0
    %360 = vmatpush1.bf16.msra.mxu0 %v322
    %361 = vmatprep.subr.bf16.mxu0 0
    %362 = vmatpush1.bf16.msra.mxu0 %v323
    %363 = vmatprep.subr.bf16.mxu0 0
    %364 = vmatpush1.bf16.msra.mxu0 %v324
    %365 = vmatprep.subr.bf16.mxu0 0
    %366 = vmatpush1.bf16.msra.mxu0 %v325
    %367 = vmatprep.subr.bf16.mxu0 0
    %368 = vmatpush1.bf16.msra.mxu0 %v326
    %369 = vmatprep.subr.bf16.mxu0 0
    %370 = vmatpush1.bf16.msra.mxu0 0
    %371 = vmatprep.subr.bf16.mxu0 0
    %372 = vmatpush1.bf16.msra.mxu0 0
    %373 = vmatprep.subr.bf16.mxu0 0
    %374 = vmatpush1.bf16.msra.mxu0 0
    %375 = vmatprep.subr.bf16.mxu0 0
    %376 = vmatpush1.bf16.msra.mxu0 0
    %377 = vmatprep.mubr.bf16.mxu0 %v340
    %378 = vmatmul.mubr.bf16.gmra.mrb[0].mxu0 %v232
    %v379 = vpop.f32.mrb[0].mxu0
    %v380 = vadd.f32 %v265, %v379
    %v381 = vpop.f32.mrb[0].mxu0
    %v382 = vpop.f32.mrb[0].mxu0
    %v383 = vadd.f32 %v265, %v382
    %v384 = vpop.f32.mrb[0].mxu0
    %385 = vmatprep.mubr.bf16.mxu0 %v343
    %386 = vmatmul.mubr.bf16.gmra.mrb[0].mxu0 %v234
    %v387 = vpop.f32.mrb[0].mxu0
    %v388 = vadd.f32 %v265, %v387
    %v389 = vpop.f32.mrb[0].mxu0
    %v390 = vpop.f32.mrb[0].mxu0
    %v391 = vadd.f32 %v265, %v390
    %v392 = vpop.f32.mrb[0].mxu0
    %393 = vdwg.mxu0
    %v394 = vmax.f32 %v380, 0.0
    %v395 = vmax.f32 %v383, 0.0
    %v396 = vmax.f32 %v388, 0.0
    %v397 = vmax.f32 %v391, 0.0
    %v398 = vpack.c.bf16 %v395, %v394
    %v399 = vpack.c.bf16 %v397, %v396
    %v400 = vld [vmem:[#allocation7] sm:$0xff]
    %v401 = vld [vmem:[#allocation7 + $0x8] sm:$0xff]
    %v402 = vld [vmem:[#allocation7 + $0x10] sm:$0xff]
    %v403 = vld [vmem:[#allocation7 + $0x18] sm:$0xff]
    %v404 = vld [vmem:[#allocation7 + $0x20] sm:$0xff]
    %v405 = vld [vmem:[#allocation7 + $0x28] sm:$0xff]
    %v406 = vld [vmem:[#allocation7 + $0x30] sm:$0xff]
    %v407 = vld [vmem:[#allocation7 + $0x38] sm:$0xff]
    %v408 = vld [vmem:[#allocation7 + $0x40] sm:$0xff]
    %v409 = vld [vmem:[#allocation7 + $0x48] sm:$0xff]
    %v410 = vld [vmem:[#allocation7 + $0x50] sm:$0xff]
    %v411 = vld [vmem:[#allocation7 + $0x58] sm:$0xff]
    %v412 = vld [vmem:[#allocation7 + $0x60] sm:$0xff]
    %v413 = vld [vmem:[#allocation7 + $0x68] sm:$0xff]
    %v414 = vld [vmem:[#allocation7 + $0x70] sm:$0xff]
    %v415 = vld [vmem:[#allocation7 + $0x78] sm:$0xff]
    %v432 = vunpack.c.l.b16 %v400
    %v433 = vunpack.c.h.b16 %v400
    %v434 = vunpack.c.l.b16 %v401
    %v435 = vunpack.c.h.b16 %v401
    %v436 = vunpack.c.l.b16 %v402
    %v437 = vunpack.c.h.b16 %v402
    %v438 = vunpack.c.l.b16 %v403
    %v439 = vunpack.c.h.b16 %v403
    %v440 = vunpack.c.l.b16 %v404
    %v441 = vunpack.c.h.b16 %v404
    %v442 = vunpack.c.l.b16 %v405
    %v443 = vunpack.c.h.b16 %v405
    %v444 = vunpack.c.l.b16 %v406
    %v445 = vunpack.c.h.b16 %v406
    %v446 = vunpack.c.l.b16 %v407
    %v447 = vunpack.c.h.b16 %v407
    %v448 = vunpack.c.l.b16 %v408
    %v449 = vunpack.c.h.b16 %v408
    %v450 = vunpack.c.l.b16 %v409
    %v451 = vunpack.c.h.b16 %v409
    %v452 = vunpack.c.l.b16 %v410
    %v453 = vunpack.c.h.b16 %v410
    %v454 = vunpack.c.l.b16 %v411
    %v455 = vunpack.c.h.b16 %v411
    %v456 = vunpack.c.l.b16 %v412
    %v457 = vunpack.c.h.b16 %v412
    %v458 = vunpack.c.l.b16 %v413
    %v459 = vunpack.c.h.b16 %v413
    %v460 = vunpack.c.l.b16 %v414
    %v461 = vunpack.c.h.b16 %v414
    %v462 = vunpack.c.l.b16 %v415
    %v463 = vunpack.c.h.b16 %v415
    %v464 = vpack.c.b16 %v434, %v432
    %v465 = vpack.c.b16 %v435, %v433
    %v466 = vpack.c.b16 %v438, %v436
    %v467 = vpack.c.b16 %v439, %v437
    %v468 = vpack.c.b16 %v442, %v440
    %v469 = vpack.c.b16 %v443, %v441
    %v470 = vpack.c.b16 %v446, %v444
    %v471 = vpack.c.b16 %v447, %v445
    %v472 = vpack.c.b16 %v450, %v448
    %v473 = vpack.c.b16 %v451, %v449
    %v474 = vpack.c.b16 %v454, %v452
    %v475 = vpack.c.b16 %v455, %v453
    %v476 = vpack.c.b16 %v458, %v456
    %v477 = vpack.c.b16 %v459, %v457
    %v478 = vpack.c.b16 %v462, %v460
    %v479 = vpack.c.b16 %v463, %v461
    %496 = vmatprep.subr.bf16.mxu0 %v465
    %497 = vmatpush1.bf16.msra.mxu0 %v464
    %498 = vmatprep.subr.bf16.mxu0 %v467
    %499 = vmatpush1.bf16.msra.mxu0 %v466
    %500 = vmatprep.subr.bf16.mxu0 %v469
    %501 = vmatpush1.bf16.msra.mxu0 %v468
    %502 = vmatprep.subr.bf16.mxu0 %v471
    %503 = vmatpush1.bf16.msra.mxu0 %v470
    %504 = vmatprep.subr.bf16.mxu0 %v473
    %505 = vmatpush1.bf16.msra.mxu0 %v472
    %506 = vmatprep.subr.bf16.mxu0 %v475
    %507 = vmatpush1.bf16.msra.mxu0 %v474
    %508 = vmatprep.subr.bf16.mxu0 %v477
    %509 = vmatpush1.bf16.msra.mxu0 %v476
    %510 = vmatprep.subr.bf16.mxu0 %v479
    %511 = vmatpush1.bf16.msra.mxu0 %v478
    %512 = vmatprep.subr.bf16.mxu0 0
    %513 = vmatpush1.bf16.msra.mxu0 0
    %514 = vmatprep.subr.bf16.mxu0 0
    %515 = vmatpush1.bf16.msra.mxu0 0
    %516 = vmatprep.subr.bf16.mxu0 0
    %517 = vmatpush1.bf16.msra.mxu0 0
    %518 = vmatprep.subr.bf16.mxu0 0
    %519 = vmatpush1.bf16.msra.mxu0 0
    %520 = vmatprep.subr.bf16.mxu0 0
    %521 = vmatpush1.bf16.msra.mxu0 0
    %522 = vmatprep.subr.bf16.mxu0 0
    %523 = vmatpush1.bf16.msra.mxu0 0
    %524 = vmatprep.subr.bf16.mxu0 0
    %525 = vmatpush1.bf16.msra.mxu0 0
    %526 = vmatprep.subr.bf16.mxu0 0
    %527 = vmatpush1.bf16.msra.mxu0 0
    %528 = vmatprep.mubr.bf16.mxu0 0
    %529 = vmatmul.mubr.bf16.gmra.mrb[0].mxu0 %v398
    %v530 = vpop.f32.mrb[0].mxu0
    %v531 = vadd.f32 0.0, %v530
    %v532 = vpop.f32.mrb[0].mxu0
    %v533 = vadd.f32 0.0, %v532
    %v534 = vpop.f32.mrb[0].mxu0
    %v535 = vadd.f32 0.0, %v534
    %v536 = vpop.f32.mrb[0].mxu0
    %v537 = vadd.f32 0.0, %v536
    %538 = vmatprep.mubr.bf16.mxu0 0
    %539 = vmatmul.mubr.bf16.gmra.mrb[0].mxu0 %v399
    %v540 = vpop.f32.mrb[0].mxu0
    %v541 = vadd.f32 0.0, %v540
    %v542 = vpop.f32.mrb[0].mxu0
    %v543 = vadd.f32 0.0, %v542
    %v544 = vpop.f32.mrb[0].mxu0
    %v545 = vadd.f32 0.0, %v544
    %v546 = vpop.f32.mrb[0].mxu0
    %v547 = vadd.f32 0.0, %v546
    %548 = vdwg.mxu0
    %v549 = vlaneseq
    %v550 = vand.u32 %v549, 127
    %v551 = vadd.s32 %v550, 128
    %v552 = vshra.s32 %v550, 4
    %v553 = vshra.s32 %v551, 4
    %vm554 = vcmp.eq.s32.totalorder %v149, %v552
    %vm555 = vcmp.eq.s32.totalorder %v149, %v553
    %vm556 = vcmp.eq.s32.totalorder %v150, %v552
    %vm557 = vcmp.eq.s32.totalorder %v150, %v553
    %vm558 = vcmp.eq.s32.totalorder %v151, %v552
    %vm559 = vcmp.eq.s32.totalorder %v151, %v553
    %vm560 = vcmp.eq.s32.totalorder %v152, %v552
    %vm561 = vcmp.eq.s32.totalorder %v152, %v553
    %v562 = vsel %vm554, %v531, 0.0
    %v563 = vsel %vm555, %v533, 0.0
    %v564 = vsel %vm556, %v535, 0.0
    %v565 = vsel %vm557, %v537, 0.0
    %v566 = vsel %vm558, %v541, 0.0
    %v567 = vsel %vm559, %v543, 0.0
    %v568 = vsel %vm560, %v545, 0.0
    %v569 = vsel %vm561, %v547, 0.0
    %574 = vrot.lane.b32.xlu0 %v562, 112
    %v575 = vpop.permute.xlu0 %574
    %576 = vrot.lane.b32.xlu0 %v564, 112
    %v577 = vpop.permute.xlu0 %576
    %578 = vrot.lane.b32.xlu0 %v566, 112
    %v579 = vpop.permute.xlu0 %578
    %580 = vrot.lane.b32.xlu0 %v568, 112
    %v581 = vpop.permute.xlu0 %580
    %v586 = vadd.f32 %v562, %v575
    %v587 = vadd.f32 %v564, %v577
    %v588 = vadd.f32 %v566, %v579
    %v589 = vadd.f32 %v568, %v581
    %594 = vrot.lane.b32.xlu0 %v563, 112
    %v595 = vpop.permute.xlu0 %594
    %596 = vrot.lane.b32.xlu0 %v565, 112
    %v597 = vpop.permute.xlu0 %596
    %598 = vrot.lane.b32.xlu0 %v567, 112
    %v599 = vpop.permute.xlu0 %598
    %600 = vrot.lane.b32.xlu0 %v569, 112
    %v601 = vpop.permute.xlu0 %600
    %v606 = vadd.f32 %v563, %v595
    %v607 = vadd.f32 %v565, %v597
    %v608 = vadd.f32 %v567, %v599
    %v609 = vadd.f32 %v569, %v601
    %614 = vrot.lane.b32.xlu0 %v586, 96
    %v615 = vpop.permute.xlu0 %614
    %616 = vrot.lane.b32.xlu0 %v587, 96
    %v617 = vpop.permute.xlu0 %616
    %618 = vrot.lane.b32.xlu0 %v588, 96
    %v619 = vpop.permute.xlu0 %618
    %620 = vrot.lane.b32.xlu0 %v589, 96
    %v621 = vpop.permute.xlu0 %620
    %v626 = vadd.f32 %v586, %v615
    %v627 = vadd.f32 %v587, %v617
    %v628 = vadd.f32 %v588, %v619
    %v629 = vadd.f32 %v589, %v621
    %634 = vrot.lane.b32.xlu0 %v606, 96
    %v635 = vpop.permute.xlu0 %634
    %636 = vrot.lane.b32.xlu0 %v607, 96
    %v637 = vpop.permute.xlu0 %636
    %638 = vrot.lane.b32.xlu0 %v608, 96
    %v639 = vpop.permute.xlu0 %638
    %640 = vrot.lane.b32.xlu0 %v609, 96
    %v641 = vpop.permute.xlu0 %640
    %v646 = vadd.f32 %v606, %v635
    %v647 = vadd.f32 %v607, %v637
    %v648 = vadd.f32 %v608, %v639
    %v649 = vadd.f32 %v609, %v641
    %654 = vrot.lane.b32.xlu0 %v626, 64
    %v655 = vpop.permute.xlu0 %654
    %656 = vrot.lane.b32.xlu0 %v627, 64
    %v657 = vpop.permute.xlu0 %656
    %658 = vrot.lane.b32.xlu0 %v628, 64
    %v659 = vpop.permute.xlu0 %658
    %660 = vrot.lane.b32.xlu0 %v629, 64
    %v661 = vpop.permute.xlu0 %660
    %v666 = vadd.f32 %v626, %v655
    %v667 = vadd.f32 %v627, %v657
    %v668 = vadd.f32 %v628, %v659
    %v669 = vadd.f32 %v629, %v661
    %674 = vrot.lane.b32.xlu0 %v646, 64
    %v675 = vpop.permute.xlu0 %674
    %676 = vrot.lane.b32.xlu0 %v647, 64
    %v677 = vpop.permute.xlu0 %676
    %678 = vrot.lane.b32.xlu0 %v648, 64
    %v679 = vpop.permute.xlu0 %678
    %680 = vrot.lane.b32.xlu0 %v649, 64
    %v681 = vpop.permute.xlu0 %680
    %v686 = vadd.f32 %v646, %v675
    %v687 = vadd.f32 %v647, %v677
    %v688 = vadd.f32 %v648, %v679
    %v689 = vadd.f32 %v649, %v681
    %v690 = vadd.f32 %v666, %v686
    %v691 = vadd.f32 %v667, %v687
    %v692 = vadd.f32 %v668, %v688
    %v693 = vadd.f32 %v669, %v689
    %vm694 = vcmp.eq.s32.totalorder %v552, %v145
    %v695 = vsel %vm694, 1, 0
    %v696 = vcvt.s32.f32 %v695
    %v697 = vld [vmem:[%s4] sm:$0x1]
    %v699 = vlaneseq
    %v700 = vshrl.u32 %v699, 7
    %v701 = vsub.s32 0, %v700
    %v702 = vrot.slane %v697, %v701
    %vm704 = vcmask 261120
    %v706 = vsel %vm704, %v696, 0
    %708 = vmatprep.subr.mxu0 0.0
    %709 = vmatpush1.msra.mxu0 %v690
    %710 = vmatprep.subr.mxu0 0.0
    %711 = vmatpush1.msra.mxu0 %v691
    %712 = vmatprep.subr.mxu0 0.0
    %713 = vmatpush1.msra.mxu0 %v692
    %714 = vmatprep.subr.mxu0 0.0
    %715 = vmatpush1.msra.mxu0 %v693
    %716 = vmatprep.subr.mxu0 0.0
    %717 = vmatpush1.msra.mxu0 0.0
    %718 = vmatprep.subr.mxu0 0.0
    %719 = vmatpush1.msra.mxu0 0.0
    %720 = vmatprep.subr.mxu0 0.0
    %721 = vmatpush1.msra.mxu0 0.0
    %722 = vmatprep.subr.mxu0 0.0
    %723 = vmatpush1.msra.mxu0 0.0
    %724 = vmatprep.subr.mxu0 0.0
    %725 = vmatpush1.msra.mxu0 0.0
    %726 = vmatprep.subr.mxu0 0.0
    %727 = vmatpush1.msra.mxu0 0.0
    %728 = vmatprep.subr.mxu0 0.0
    %729 = vmatpush1.msra.mxu0 0.0
    %730 = vmatprep.subr.mxu0 0.0
    %731 = vmatpush1.msra.mxu0 0.0
    %732 = vmatprep.subr.mxu0 0.0
    %733 = vmatpush1.msra.mxu0 0.0
    %734 = vmatprep.subr.mxu0 0.0
    %735 = vmatpush1.msra.mxu0 0.0
    %736 = vmatprep.subr.mxu0 0.0
    %737 = vmatpush1.msra.mxu0 0.0
    %738 = vmatprep.subr.mxu0 0.0
    %739 = vmatpush1.msra.mxu0 0.0
    %740 = vmatprep.subr.mxu0 0.0
    %741 = vmatpush1.msra.mxu0 0.0
    %742 = vmatprep.subr.mxu0 0.0
    %743 = vmatpush1.msra.mxu0 0.0
    %744 = vmatprep.subr.mxu0 0.0
    %745 = vmatpush1.msra.mxu0 0.0
    %746 = vmatprep.subr.mxu0 0.0
    %747 = vmatpush1.msra.mxu0 0.0
    %748 = vmatprep.subr.mxu0 0.0
    %749 = vmatpush1.msra.mxu0 0.0
    %750 = vmatprep.subr.mxu0 0.0
    %751 = vmatpush1.msra.mxu0 0.0
    %752 = vmatprep.subr.mxu0 0.0
    %753 = vmatpush1.msra.mxu0 0.0
    %754 = vmatprep.subr.mxu0 0.0
    %755 = vmatpush1.msra.mxu0 0.0
    %756 = vmatprep.subr.mxu0 0.0
    %757 = vmatpush1.msra.mxu0 0.0
    %758 = vmatprep.subr.mxu0 0.0
    %759 = vmatpush1.msra.mxu0 0.0
    %760 = vmatprep.subr.mxu0 0.0
    %761 = vmatpush1.msra.mxu0 0.0
    %762 = vmatprep.subr.mxu0 0.0
    %763 = vmatpush1.msra.mxu0 0.0
    %764 = vmatprep.subr.mxu0 0.0
    %765 = vmatpush1.msra.mxu0 0.0
    %766 = vmatprep.subr.mxu0 0.0
    %767 = vmatpush1.msra.mxu0 0.0
    %768 = vmatprep.subr.mxu0 0.0
    %769 = vmatpush1.msra.mxu0 0.0
    %770 = vmatprep.subr.mxu0 0.0
    %771 = vmatpush1.msra.mxu0 0.0
    %772 = vmatprep.mubr.f32.mxu0 0.0
    %773 = vmatmul.mubr.f32.gmra.mrb[0].mxu0 %v706
    %v774 = vpop.f32.mrb[0].mxu0
    %v775 = vadd.f32 %v702, %v774
    %v776 = vpop.f32.mrb[0].mxu0
    %777 = vdwg.mxu0
    %vm778 = vcmask 74752
    %779 = vst.msk [vmem:[#allocation8] sm:$0x3] %vm778, %v775
    // Predicated region
    $region34: #{decoupled_model_forward.1} parent=1 // pred_check
      _
    $region35: #{decoupled_model_forward.1} parent=1 // pred_check_branch
      %781 = sbr.rel (0) target = $region37
    $region36: #{decoupled_model_forward.1} parent=1 // pred_region
      %s783 = ssub.s32 32, 32
      %784 = vsyncadd [#allocation4], %s783
      %s786 = sshll.u32 [#allocation8], 4
      %s787 = int_to_ptr.vmem [resolvable:$true] %s786
      %789 = dma.vmem_to_hbm [thread:$0]  %s787, 32, %s5, [#allocation4]
    $region37: #{decoupled_model_forward.1} parent=1 // pred_fallthru
      _
    // Predicated region
    $region38: #{decoupled_model_forward.1} parent=1 // pred_check
      _
    $region39: #{decoupled_model_forward.1} parent=1 // pred_check_branch
      %791 = sbr.rel (0) target = $region41
    $region40: #{decoupled_model_forward.1} parent=1 // pred_region
      %792 = dma.done [#allocation4], 32
    $region41: #{decoupled_model_forward.1} parent=1 // pred_fallthru
      _
    %793 = vsyncpa [#allocation3], 1
    %794 = vsyncpa [#allocation6], 1
    %795 = vsyncpa [#allocation4], 1

</llo_original>
